<compile_context>
chip_gen: v7x
topology: tpu7x:2x2x1
jax: 0.10.0
libtpu: 0.0.40
codegen_flags: <defaults>
</compile_context>

<pallas_src>
import functools

import jax
import jax.numpy as jnp
from jax.experimental import pallas as pl
from jax.experimental.pallas import tpu as pltpu

LANE = 128      # vreg lane width  (last dim)
SUBLANE = 8     # vreg sublane width (second-to-last dim)

VMEM_BUDGET_BYTES = 40 * 1024 * 1024   # budget used to derive the batch tile
VMEM_LIMIT_BYTES = 48 * 1024 * 1024    # requested scoped VMEM (safe on v7x's 64 MiB)
MAX_BLOCK_BATCH = 4096                 # per-step overhead is negligible past this


def _round_up(x, m):
    return ((x + m - 1) // m) * m


def _cast(a, dt):
    # Trace-time no-op when dtypes already match (f32 path).
    return a if a.dtype == dt else a.astype(dt)


# ----------------------------------------------------------------------------
# Kernel
# ----------------------------------------------------------------------------
def generator_kernel(x_ref, w1_ref, b1_ref, w2_ref, b2_ref, w3_ref, b3_ref, o_ref):
    """Fused 3-layer MLP on one (tb, in_f) batch tile. Weights are VMEM-resident."""
    wdt = w1_ref.dtype  # matmul operand dtype (f32, or bf16 at scale); acc is f32.

    # Layer 1: Linear + LeakyReLU(0.2). K = logical input width (unpadded).
    h = jnp.dot(_cast(x_ref[...], wdt), w1_ref[...],
                preferred_element_type=jnp.float32) + b1_ref[...]
    h = jnp.maximum(h, 0.2 * h)

    # Layer 2: Linear + LeakyReLU(0.2). Hidden dims are lane-padded -> dense MXU tiles.
    h = jnp.dot(_cast(h, wdt), w2_ref[...],
                preferred_element_type=jnp.float32) + b2_ref[...]
    h = jnp.maximum(h, 0.2 * h)

    # Layer 3: Linear + Tanh. Output is written at the logical width (no padded cols).
    h = jnp.dot(_cast(h, wdt), w3_ref[...],
                preferred_element_type=jnp.float32) + b3_ref[...]
    o_ref[...] = jnp.tanh(h).astype(o_ref.dtype)


# ----------------------------------------------------------------------------
# Wrapper
# ----------------------------------------------------------------------------
def _derive_block_batch(in_f, out_f, hid_p, weight_bytes, x_itemsize, out_itemsize):
    """Largest batch tile that fits the per-TC VMEM budget.

    Per-row VMEM footprint:
      * double-buffered x tile   : 2 * in_f  * x_itemsize
      * double-buffered out tile : 2 * out_f * out_itemsize
      * live f32 intermediates   : ~3 * hid_p * 4   (h + matmul temporaries)
    plus the resident (constant index_map) weights/biases.
    """
    per_row = 2 * in_f * x_itemsize + 2 * out_f * out_itemsize + 3 * hid_p * 4
    avail = max(VMEM_BUDGET_BYTES - weight_bytes, per_row * SUBLANE)
    tb = (avail // per_row) // SUBLANE * SUBLANE
    return int(max(SUBLANE, min(tb, MAX_BLOCK_BATCH)))


@functools.partial(jax.jit, static_argnums=(2,))
def generator_forward(x, params, block_batch=None):
    """Runs the fused Generator forward pass.

    Args:
      x:           (B, input_size) float array (logical, unpadded).
      params:      output of `prepare_generator_params` (hidden dim lane-padded).
      block_batch: optional batch-tile override (rounded to a multiple of 8);
                   None -> derived from the VMEM budget (preferred).
    Returns:
      (B, output_size) array in x.dtype.
    """
    w1, b1, w2, b2, w3, b3 = params
    B, in_f = x.shape
    hid_p = w1.shape[1]
    out_f = w3.shape[1]
    out_dtype = x.dtype
    out_itemsize = jnp.dtype(out_dtype).itemsize

    weight_bytes = sum(int(a.size) * a.dtype.itemsize for a in params)

    if block_batch is None:
        tb = _derive_block_batch(in_f, out_f, hid_p, weight_bytes,
                                 x.dtype.itemsize, out_itemsize)
    else:
        tb = max(SUBLANE, _round_up(int(block_batch), SUBLANE))
    tb = min(tb, _round_up(B, SUBLANE))

    b_pad = _round_up(B, tb)
    if b_pad != B:
        # Only the batch dim is padded (last partial tile). Feature dims stay
        # at logical width, so there is no column inflation / extra HBM pass.
        x = jnp.pad(x, ((0, b_pad - B), (0, 0)))

    grid = (b_pad // tb,)

    # Advisory cost estimate for XLA's scheduler.
    flops = 2 * b_pad * (in_f * hid_p + hid_p * hid_p + hid_p * out_f)
    bytes_accessed = int(weight_bytes
                         + b_pad * in_f * x.dtype.itemsize
                         + b_pad * out_f * out_itemsize)

    out = pl.pallas_call(
        generator_kernel,
        out_shape=jax.ShapeDtypeStruct((b_pad, out_f), out_dtype),
        grid_spec=pltpu.PrefetchScalarGridSpec(
            num_scalar_prefetch=0,
            grid=grid,
            in_specs=[
                # Activations: streamed per batch tile (auto double-buffered).
                pl.BlockSpec((tb, in_f), lambda i: (i, 0)),
                # Weights / biases: same block every step -> VMEM-resident.
                pl.BlockSpec((in_f, hid_p), lambda i: (0, 0)),
                pl.BlockSpec((1, hid_p), lambda i: (0, 0)),
                pl.BlockSpec((hid_p, hid_p), lambda i: (0, 0)),
                pl.BlockSpec((1, hid_p), lambda i: (0, 0)),
                pl.BlockSpec((hid_p, out_f), lambda i: (0, 0)),
                pl.BlockSpec((1, out_f), lambda i: (0, 0)),
            ],
            out_specs=pl.BlockSpec((tb, out_f), lambda i: (i, 0)),
        ),
        compiler_params=pltpu.CompilerParams(
            # Independent batch tiles; shard across TCs where supported.
            # TODO(synk): if an xprof on v7x shows one TC idle, switch to
            # pltpu.CORE_PARALLEL (only core-parallel semantics change codegen).
            dimension_semantics=("parallel",),
            # Above scoped defaults on every gen, under v7x's 64 MiB physical.
            vmem_limit_bytes=VMEM_LIMIT_BYTES,
        ),
        cost_estimate=pl.CostEstimate(
            flops=flops,
            transcendentals=b_pad * out_f,
            bytes_accessed=bytes_accessed,
        ),
    )(x, w1, b1, w2, b2, w3, b3)

    return out[:B] if b_pad != B else out


# ----------------------------------------------------------------------------
# Parameter init / preparation
# ----------------------------------------------------------------------------
def init_generator_params(key, input_size, hidden_size, output_size):
    """Deterministic PyTorch-like uniform fan-in init at *logical* shapes."""
    ks = jax.random.split(key, 6)

    def linear(kw, kb, fan_in, fan_out):
        bound = 1.0 / jnp.sqrt(fan_in)
        w = jax.random.uniform(kw, (fan_in, fan_out), jnp.float32, -bound, bound)
        b = jax.random.uniform(kb, (1, fan_out), jnp.float32, -bound, bound)
        return w, b

    w1, b1 = linear(ks[0], ks[1], input_size, hidden_size)
    w2, b2 = linear(ks[2], ks[3], hidden_size, hidden_size)
    w3, b3 = linear(ks[4], ks[5], hidden_size, output_size)
    return (w1, b1, w2, b2, w3, b3)


def prepare_generator_params(params, weight_dtype=jnp.float32, lane_multiple=LANE):
    """One-time preparation: pad only the *hidden* feature dim to the lane multiple.

    Input/output feature dims stay at their logical width so activation and
    output HBM traffic is not inflated; hidden intermediates never touch HBM,
    so padding them is free and keeps the two big matmuls lane-dense.

    weight_dtype=jnp.bfloat16 is recommended on all generations once a
    looser-tolerance test is in place (v5e's MXU is bf16-native; f32 matmuls
    are multi-pass). The epilogue (bias add, LeakyReLU, tanh) always runs f32.
    lane_multiple=256 recovers MXU utilization on v6e/v7x (2x256^2 arrays) if
    the hidden size is scaled up and the kernel becomes MXU-bound.
    """
    w1, b1, w2, b2, w3, b3 = params
    in_f = w1.shape[0]
    hid = w1.shape[1]
    out_f = w3.shape[1]
    hid_p = _round_up(hid, lane_multiple)

    def pad_w(w, rows, cols):
        out = jnp.zeros((rows, cols), weight_dtype)
        return out.at[:w.shape[0], :w.shape[1]].set(w.astype(weight_dtype))

    def pad_b(b, cols):
        out = jnp.zeros((1, cols), jnp.float32)
        return out.at[:, :b.shape[1]].set(b.astype(jnp.float32))

    return (pad_w(w1, in_f, hid_p), pad_b(b1, hid_p),
            pad_w(w2, hid_p, hid_p), pad_b(b2, hid_p),
            pad_w(w3, hid_p, out_f), pad_b(b3, out_f))


def generator_reference(x, params):
    """Pure-JAX reference (logical shapes) for correctness checking."""
    w1, b1, w2, b2, w3, b3 = params
    h = x @ w1 + b1
    h = jnp.where(h >= 0, h, 0.2 * h)
    h = h @ w2 + b2
    h = jnp.where(h >= 0, h, 0.2 * h)
    h = h @ w3 + b3
    return jnp.tanh(h)


if __name__ == "__main__":
    key = jax.random.PRNGKey(0)
    k_x, k_p = jax.random.split(key)

    batch = 64
    input_size = 16
    hidden_size = 32
    output_size = 16

    x = jax.random.normal(k_x, (batch, input_size), dtype=jnp.float32)
    params = init_generator_params(k_p, input_size, hidden_size, output_size)

    # f32 weights at toy sizes so the 1e-5 allclose check below is meaningful.
    prepared = prepare_generator_params(params, weight_dtype=jnp.float32)

    ref = generator_reference(x, params)

    # Small explicit tile so the batch grid actually has multiple steps here.
    out = generator_forward(x, prepared, 16)
    out = jax.block_until_ready(out)
    assert out.shape == (batch, output_size)
    assert jnp.allclose(out, ref, atol=1e-5, rtol=1e-5)

    # Also exercise the default VMEM-budget-derived (maximal) tile path.
    out2 = jax.block_until_ready(generator_forward(x, prepared, None))
    assert jnp.allclose(out2, ref, atol=1e-5, rtol=1e-5)

    print("KERNEL_OK")
</pallas_src>

<mosaic_0001>
module attributes {stable_mosaic.version = 11 : i64} {
  func.func @generator_kernel(%arg0: i32, %arg1: memref<16x16xf32, #tpu.memory_space<vmem>>, %arg2: memref<16x128xf32, #tpu.memory_space<vmem>>, %arg3: memref<1x128xf32, #tpu.memory_space<vmem>>, %arg4: memref<128x128xf32, #tpu.memory_space<vmem>>, %arg5: memref<1x128xf32, #tpu.memory_space<vmem>>, %arg6: memref<128x16xf32, #tpu.memory_space<vmem>>, %arg7: memref<1x16xf32, #tpu.memory_space<vmem>>, %arg8: memref<16x16xf32, #tpu.memory_space<vmem>>) attributes {dimension_semantics = [#tpu.dimension_semantics<parallel>], iteration_bounds = array<i64: 4>, scalar_prefetch = 0 : i64, scratch_operands = 0 : i64, tpu.core_type = #tpu.core_type<tc>, window_params = [{transform_indices = @transform_0, window_bounds = array<i64: 16, 16>}, {pipeline_mode = #tpu.pipeline_mode<synchronous>, transform_indices = @transform_1, window_bounds = array<i64: 16, 128>}, {pipeline_mode = #tpu.pipeline_mode<synchronous>, transform_indices = @transform_2, window_bounds = array<i64: 1, 128>}, {pipeline_mode = #tpu.pipeline_mode<synchronous>, transform_indices = @transform_3, window_bounds = array<i64: 128, 128>}, {pipeline_mode = #tpu.pipeline_mode<synchronous>, transform_indices = @transform_4, window_bounds = array<i64: 1, 128>}, {pipeline_mode = #tpu.pipeline_mode<synchronous>, transform_indices = @transform_5, window_bounds = array<i64: 128, 16>}, {pipeline_mode = #tpu.pipeline_mode<synchronous>, transform_indices = @transform_6, window_bounds = array<i64: 1, 16>}, {transform_indices = @transform_7, window_bounds = array<i64: 16, 16>}]} {
    %c0 = arith.constant 0 : index
    %c0_0 = arith.constant 0 : index
    %0 = vector.load %arg1[%c0, %c0_0] : memref<16x16xf32, #tpu.memory_space<vmem>>, vector<16x16xf32>
    %c0_1 = arith.constant 0 : index
    %c0_2 = arith.constant 0 : index
    %1 = vector.load %arg2[%c0_1, %c0_2] : memref<16x128xf32, #tpu.memory_space<vmem>>, vector<16x128xf32>
    %cst = arith.constant dense<0.000000e+00> : vector<16x128xf32>
    %2 = tpu.matmul %0, %1, %cst {dimension_numbers = #tpu.dot_dimension_numbers<[1], [0], [0], [1], [0, 0, 1, 1], [], []>} : vector<16x16xf32>, vector<16x128xf32>, vector<16x128xf32> -> vector<16x128xf32>
    %c0_3 = arith.constant 0 : index
    %c0_4 = arith.constant 0 : index
    %3 = vector.load %arg3[%c0_3, %c0_4] : memref<1x128xf32, #tpu.memory_space<vmem>>, vector<1x128xf32>
    %4 = vector.broadcast %3 : vector<1x128xf32> to vector<16x128xf32>
    %5 = arith.addf %2, %4 : vector<16x128xf32>
    %cst_5 = arith.constant 2.000000e-01 : f32
    %6 = vector.broadcast %cst_5 : f32 to vector<16x128xf32>
    %7 = arith.mulf %6, %5 : vector<16x128xf32>
    %8 = arith.maximumf %5, %7 : vector<16x128xf32>
    %c0_6 = arith.constant 0 : index
    %c0_7 = arith.constant 0 : index
    %9 = vector.load %arg4[%c0_6, %c0_7] : memref<128x128xf32, #tpu.memory_space<vmem>>, vector<128x128xf32>
    %cst_8 = arith.constant dense<0.000000e+00> : vector<16x128xf32>
    %10 = tpu.matmul %8, %9, %cst_8 {dimension_numbers = #tpu.dot_dimension_numbers<[1], [0], [0], [1], [0, 0, 1, 1], [], []>} : vector<16x128xf32>, vector<128x128xf32>, vector<16x128xf32> -> vector<16x128xf32>
    %c0_9 = arith.constant 0 : index
    %c0_10 = arith.constant 0 : index
    %11 = vector.load %arg5[%c0_9, %c0_10] : memref<1x128xf32, #tpu.memory_space<vmem>>, vector<1x128xf32>
    %12 = vector.broadcast %11 : vector<1x128xf32> to vector<16x128xf32>
    %13 = arith.addf %10, %12 : vector<16x128xf32>
    %cst_11 = arith.constant 2.000000e-01 : f32
    %14 = vector.broadcast %cst_11 : f32 to vector<16x128xf32>
    %15 = arith.mulf %14, %13 : vector<16x128xf32>
    %16 = arith.maximumf %13, %15 : vector<16x128xf32>
    %c0_12 = arith.constant 0 : index
    %c0_13 = arith.constant 0 : index
    %17 = vector.load %arg6[%c0_12, %c0_13] : memref<128x16xf32, #tpu.memory_space<vmem>>, vector<128x16xf32>
    %cst_14 = arith.constant dense<0.000000e+00> : vector<16x16xf32>
    %18 = tpu.matmul %16, %17, %cst_14 {dimension_numbers = #tpu.dot_dimension_numbers<[1], [0], [0], [1], [0, 0, 1, 1], [], []>} : vector<16x128xf32>, vector<128x16xf32>, vector<16x16xf32> -> vector<16x16xf32>
    %c0_15 = arith.constant 0 : index
    %c0_16 = arith.constant 0 : index
    %19 = vector.load %arg7[%c0_15, %c0_16] : memref<1x16xf32, #tpu.memory_space<vmem>>, vector<1x16xf32>
    %20 = vector.broadcast %19 : vector<1x16xf32> to vector<16x16xf32>
    %21 = arith.addf %18, %20 : vector<16x16xf32>
    %22 = math.tanh %21 : vector<16x16xf32>
    %c0_17 = arith.constant 0 : index
    %c0_18 = arith.constant 0 : index
    %23 = vector.load %arg8[%c0_17, %c0_18] : memref<16x16xf32, #tpu.memory_space<vmem>>, vector<16x16xf32>
    tpu.vector_store %arg8[%c0_17, %c0_18], %22 {strides = array<i32>} : memref<16x16xf32, #tpu.memory_space<vmem>>, vector<16x16xf32>,
    return
  }
  func.func @transform_0(%arg0: i32) -> (i32, i32) {
    %c0_i32 = arith.constant 0 : i32
    %c0_i32_0 = arith.constant 0 : i32
    return %arg0, %c0_i32 : i32, i32
  }
  func.func @transform_1(%arg0: i32) -> (i32, i32) {
    %c0_i32 = arith.constant 0 : i32
    %c0_i32_0 = arith.constant 0 : i32
    %c0_i32_1 = arith.constant 0 : i32
    return %c0_i32, %c0_i32_0 : i32, i32
  }
  func.func @transform_2(%arg0: i32) -> (i32, i32) {
    %c0_i32 = arith.constant 0 : i32
    %c0_i32_0 = arith.constant 0 : i32
    %c0_i32_1 = arith.constant 0 : i32
    return %c0_i32, %c0_i32_0 : i32, i32
  }
  func.func @transform_3(%arg0: i32) -> (i32, i32) {
    %c0_i32 = arith.constant 0 : i32
    %c0_i32_0 = arith.constant 0 : i32
    %c0_i32_1 = arith.constant 0 : i32
    return %c0_i32, %c0_i32_0 : i32, i32
  }
  func.func @transform_4(%arg0: i32) -> (i32, i32) {
    %c0_i32 = arith.constant 0 : i32
    %c0_i32_0 = arith.constant 0 : i32
    %c0_i32_1 = arith.constant 0 : i32
    return %c0_i32, %c0_i32_0 : i32, i32
  }
  func.func @transform_5(%arg0: i32) -> (i32, i32) {
    %c0_i32 = arith.constant 0 : i32
    %c0_i32_0 = arith.constant 0 : i32
    %c0_i32_1 = arith.constant 0 : i32
    return %c0_i32, %c0_i32_0 : i32, i32
  }
  func.func @transform_6(%arg0: i32) -> (i32, i32) {
    %c0_i32 = arith.constant 0 : i32
    %c0_i32_0 = arith.constant 0 : i32
    %c0_i32_1 = arith.constant 0 : i32
    return %c0_i32, %c0_i32_0 : i32, i32
  }
  func.func @transform_7(%arg0: i32) -> (i32, i32) {
    %c0_i32 = arith.constant 0 : i32
    %c0_i32_0 = arith.constant 0 : i32
    return %arg0, %c0_i32 : i32, i32
  }
}

</mosaic_0001>

<llo_original>
// kernel: generator_forward.1
$region0: #{generator_forward.1}
  #allocation0 [shape = 'u32[]', space=smem, size = 0x4, offset = 0x4, fixed_abs, tag = 'smem constant byte address 0x4 - core index']
  #allocation1 [shape = 'u32[144,128]{1,0:T(1,128)}', space=vmem, size = 0x12000, scoped, tag = 'internal scratch']
  %s0 = inlined_call_operand.vmem [shape: f32[64,16], index: 0, kind: input, shape index: {}]
  %s1 = inlined_call_operand.vmem [shape: f32[16,128], index: 1, kind: input, shape index: {}]
  %s2 = inlined_call_operand.vmem [shape: f32[1,128], index: 2, kind: input, shape index: {}]
  %s3 = inlined_call_operand.vmem [shape: f32[128,128], index: 3, kind: input, shape index: {}]
  %s4 = inlined_call_operand.vmem [shape: f32[1,128], index: 4, kind: input, shape index: {}]
  %s5 = inlined_call_operand.vmem [shape: f32[128,16], index: 5, kind: input, shape index: {}]
  %s6 = inlined_call_operand.vmem [shape: f32[1,16], index: 6, kind: input, shape index: {}]
  %s7 = inlined_call_operand.vmem [shape: f32[64,16], index: 7, kind: output, shape index: {}]
  %s8 = sld [smem:[#allocation0]]
  $region61: #{generator_forward.1} parent=0
    _
  %s10 = ssub.s32 1, %s8
  %s11 = scalar_select 0, %s10, %s8
  loop: start=0, step=1, limit=6
  $region2: #{generator_forward.1} parent=0 // loop_pre_header
    _
  $region3: #{generator_forward.1} parent=0 // loop_header
    %s13 = sphi 0, %s17
    %p14 = scmp.ge.s32.totalorder %s13, 6
    %s23 = sphi 0, %s25
    %s26 = sphi 0, %s23
    %s27 = sphi 0, %s26
    %s43 = sphi 0, %s27
    %s47 = sphi 0, %s47
    %s49 = sphi 0, %s47
    %s50 = sphi 0, %s49
    %s64 = sphi 0, %s50
    %s68 = sphi 0, %s68
    %s70 = sphi 0, %s68
    %s71 = sphi 0, %s70
    %s85 = sphi 0, %s71
    %s89 = sphi 0, %s89
    %s91 = sphi 0, %s89
    %s92 = sphi 0, %s91
    %s106 = sphi 0, %s92
    %s110 = sphi 0, %s110
    %s112 = sphi 0, %s110
    %s113 = sphi 0, %s112
    %s127 = sphi 0, %s113
    %s131 = sphi 0, %s131
    %s133 = sphi 0, %s131
    %s134 = sphi 0, %s133
    %s148 = sphi 0, %s134
    %s152 = sphi 0, %s152
    %s154 = sphi 0, %s152
    %s155 = sphi 0, %s154
    %s169 = sphi 0, %s155
    %s175 = sphi 0, %s177
    %s178 = sphi 0, %s175
    %s179 = sphi 0, %s178
    %s195 = sphi 0, %s179
  $region4: #{generator_forward.1} parent=0 // loop_header_branch
    %16 = sbr.rel (%p14) target = $region8
  $region5: #{generator_forward.1} parent=0 // loop_body
    %s18 = ssub.s32 %s13, 1
    %s19 = ssub.s32 %s13, 2
    %s20 = sadd.s32 %s13, 1
    %s21 = ssub.s32 %s13, %s20
    %p22 = scmp.eq.s32.totalorder %s21, 0
    %s24 = sadd.s32 %s23, 1
    %s25 = scalar_select %p22, %s23, %s24
    %p28 = pneg %p22
    %p29 = scmp.eq.s32.totalorder %s13, 3
    %p30 = por %p28, %p29
    %p31 = scmp.ne.s32.totalorder %s23, %s26
    %p32 = scmp.eq.s32.totalorder %s13, 0
    %p33 = por %p31, %p32
    %p34 = scmp.ne.s32.totalorder %s23, %s26
    %p35 = scmp.eq.s32.totalorder %s18, 3
    %p36 = por %p34, %p35
    %p37 = scmp.ne.s32.totalorder %s26, %s27
    %p38 = scmp.eq.s32.totalorder %s18, 0
    %p39 = por %p37, %p38
    %p40 = scmp.ne.s32.totalorder %s26, %s27
    %p41 = scmp.eq.s32.totalorder %s19, 3
    %p42 = por %p40, %p41
    %p44 = scmp.ne.s32.totalorder %s27, %s43
    %p45 = scmp.eq.s32.totalorder %s19, 0
    %p46 = por %p44, %p45
    %s48 = sadd.s32 %s47, 1
    %p51 = scmp.eq.s32.totalorder %s13, 3
    %p52 = scmp.ne.s32.totalorder %s47, %s49
    %p53 = scmp.eq.s32.totalorder %s13, 0
    %p54 = por %p52, %p53
    %p55 = scmp.ne.s32.totalorder %s47, %s49
    %p56 = scmp.eq.s32.totalorder %s18, 3
    %p57 = por %p55, %p56
    %p58 = scmp.ne.s32.totalorder %s49, %s50
    %p59 = scmp.eq.s32.totalorder %s18, 0
    %p60 = por %p58, %p59
    %p61 = scmp.ne.s32.totalorder %s49, %s50
    %p62 = scmp.eq.s32.totalorder %s19, 3
    %p63 = por %p61, %p62
    %p65 = scmp.ne.s32.totalorder %s50, %s64
    %p66 = scmp.eq.s32.totalorder %s19, 0
    %p67 = por %p65, %p66
    %s69 = sadd.s32 %s68, 1
    %p72 = scmp.eq.s32.totalorder %s13, 3
    %p73 = scmp.ne.s32.totalorder %s68, %s70
    %p74 = scmp.eq.s32.totalorder %s13, 0
    %p75 = por %p73, %p74
    %p76 = scmp.ne.s32.totalorder %s68, %s70
    %p77 = scmp.eq.s32.totalorder %s18, 3
    %p78 = por %p76, %p77
    %p79 = scmp.ne.s32.totalorder %s70, %s71
    %p80 = scmp.eq.s32.totalorder %s18, 0
    %p81 = por %p79, %p80
    %p82 = scmp.ne.s32.totalorder %s70, %s71
    %p83 = scmp.eq.s32.totalorder %s19, 3
    %p84 = por %p82, %p83
    %p86 = scmp.ne.s32.totalorder %s71, %s85
    %p87 = scmp.eq.s32.totalorder %s19, 0
    %p88 = por %p86, %p87
    %s90 = sadd.s32 %s89, 1
    %p93 = scmp.eq.s32.totalorder %s13, 3
    %p94 = scmp.ne.s32.totalorder %s89, %s91
    %p95 = scmp.eq.s32.totalorder %s13, 0
    %p96 = por %p94, %p95
    %p97 = scmp.ne.s32.totalorder %s89, %s91
    %p98 = scmp.eq.s32.totalorder %s18, 3
    %p99 = por %p97, %p98
    %p100 = scmp.ne.s32.totalorder %s91, %s92
    %p101 = scmp.eq.s32.totalorder %s18, 0
    %p102 = por %p100, %p101
    %p103 = scmp.ne.s32.totalorder %s91, %s92
    %p104 = scmp.eq.s32.totalorder %s19, 3
    %p105 = por %p103, %p104
    %p107 = scmp.ne.s32.totalorder %s92, %s106
    %p108 = scmp.eq.s32.totalorder %s19, 0
    %p109 = por %p107, %p108
    %s111 = sadd.s32 %s110, 1
    %p114 = scmp.eq.s32.totalorder %s13, 3
    %p115 = scmp.ne.s32.totalorder %s110, %s112
    %p116 = scmp.eq.s32.totalorder %s13, 0
    %p117 = por %p115, %p116
    %p118 = scmp.ne.s32.totalorder %s110, %s112
    %p119 = scmp.eq.s32.totalorder %s18, 3
    %p120 = por %p118, %p119
    %p121 = scmp.ne.s32.totalorder %s112, %s113
    %p122 = scmp.eq.s32.totalorder %s18, 0
    %p123 = por %p121, %p122
    %p124 = scmp.ne.s32.totalorder %s112, %s113
    %p125 = scmp.eq.s32.totalorder %s19, 3
    %p126 = por %p124, %p125
    %p128 = scmp.ne.s32.totalorder %s113, %s127
    %p129 = scmp.eq.s32.totalorder %s19, 0
    %p130 = por %p128, %p129
    %s132 = sadd.s32 %s131, 1
    %p135 = scmp.eq.s32.totalorder %s13, 3
    %p136 = scmp.ne.s32.totalorder %s131, %s133
    %p137 = scmp.eq.s32.totalorder %s13, 0
    %p138 = por %p136, %p137
    %p139 = scmp.ne.s32.totalorder %s131, %s133
    %p140 = scmp.eq.s32.totalorder %s18, 3
    %p141 = por %p139, %p140
    %p142 = scmp.ne.s32.totalorder %s133, %s134
    %p143 = scmp.eq.s32.totalorder %s18, 0
    %p144 = por %p142, %p143
    %p145 = scmp.ne.s32.totalorder %s133, %s134
    %p146 = scmp.eq.s32.totalorder %s19, 3
    %p147 = por %p145, %p146
    %p149 = scmp.ne.s32.totalorder %s134, %s148
    %p150 = scmp.eq.s32.totalorder %s19, 0
    %p151 = por %p149, %p150
    %s153 = sadd.s32 %s152, 1
    %p156 = scmp.eq.s32.totalorder %s13, 3
    %p157 = scmp.ne.s32.totalorder %s152, %s154
    %p158 = scmp.eq.s32.totalorder %s13, 0
    %p159 = por %p157, %p158
    %p160 = scmp.ne.s32.totalorder %s152, %s154
    %p161 = scmp.eq.s32.totalorder %s18, 3
    %p162 = por %p160, %p161
    %p163 = scmp.ne.s32.totalorder %s154, %s155
    %p164 = scmp.eq.s32.totalorder %s18, 0
    %p165 = por %p163, %p164
    %p166 = scmp.ne.s32.totalorder %s154, %s155
    %p167 = scmp.eq.s32.totalorder %s19, 3
    %p168 = por %p166, %p167
    %p170 = scmp.ne.s32.totalorder %s155, %s169
    %p171 = scmp.eq.s32.totalorder %s19, 0
    %p172 = por %p170, %p171
    %s173 = ssub.s32 %s13, %s20
    %p174 = scmp.eq.s32.totalorder %s173, 0
    %s176 = sadd.s32 %s175, 1
    %s177 = scalar_select %p174, %s175, %s176
    %p180 = pneg %p174
    %p181 = scmp.eq.s32.totalorder %s13, 3
    %p182 = por %p180, %p181
    %p183 = scmp.ne.s32.totalorder %s175, %s178
    %p184 = scmp.eq.s32.totalorder %s13, 0
    %p185 = por %p183, %p184
    %p186 = scmp.ne.s32.totalorder %s175, %s178
    %p187 = scmp.eq.s32.totalorder %s18, 3
    %p188 = por %p186, %p187
    %p189 = scmp.ne.s32.totalorder %s178, %s179
    %p190 = scmp.eq.s32.totalorder %s18, 0
    %p191 = por %p189, %p190
    %p192 = scmp.ne.s32.totalorder %s178, %s179
    %p193 = scmp.eq.s32.totalorder %s19, 3
    %p194 = por %p192, %p193
    %p196 = scmp.ne.s32.totalorder %s179, %s195
    %p197 = scmp.eq.s32.totalorder %s19, 0
    %p198 = por %p196, %p197
    %p199 = scmp.le.s32.totalorder 1, %s13
    %p200 = scmp.lt.s32.totalorder %s13, 5
    %p201 = pnand %p199, %p200
    %p202 = pneg %p201
    // Predicated region
    $region9: #{generator_forward.1} parent=5 // pred_check
      _
    $region10: #{generator_forward.1} parent=5 // pred_check_branch
      %204 = sbr.rel (%p201) target = $region12
    $region11: #{generator_forward.1} parent=5 // pred_region
      %s205 = ssub.s32 %s13, 1
      // Predicated region
      $region13: #{generator_forward.1} parent=11 // pred_check
        %p206 = pneg %p60
      $region14: #{generator_forward.1} parent=11 // pred_check_branch
        %208 = sbr.rel (%p206) target = $region16
      $region15: #{generator_forward.1} parent=11 // pred_region
        _
      $region16: #{generator_forward.1} parent=11 // pred_fallthru
        _
      // Predicated region
      $region17: #{generator_forward.1} parent=11 // pred_check
        %p209 = pneg %p81
      $region18: #{generator_forward.1} parent=11 // pred_check_branch
        %211 = sbr.rel (%p209) target = $region20
      $region19: #{generator_forward.1} parent=11 // pred_region
        _
      $region20: #{generator_forward.1} parent=11 // pred_fallthru
        _
      // Predicated region
      $region21: #{generator_forward.1} parent=11 // pred_check
        %p212 = pneg %p102
      $region22: #{generator_forward.1} parent=11 // pred_check_branch
        %214 = sbr.rel (%p212) target = $region24
      $region23: #{generator_forward.1} parent=11 // pred_region
        _
      $region24: #{generator_forward.1} parent=11 // pred_fallthru
        _
      // Predicated region
      $region25: #{generator_forward.1} parent=11 // pred_check
        %p215 = pneg %p123
      $region26: #{generator_forward.1} parent=11 // pred_check_branch
        %217 = sbr.rel (%p215) target = $region28
      $region27: #{generator_forward.1} parent=11 // pred_region
        _
      $region28: #{generator_forward.1} parent=11 // pred_fallthru
        _
      // Predicated region
      $region29: #{generator_forward.1} parent=11 // pred_check
        %p218 = pneg %p144
      $region30: #{generator_forward.1} parent=11 // pred_check_branch
        %220 = sbr.rel (%p218) target = $region32
      $region31: #{generator_forward.1} parent=11 // pred_region
        _
      $region32: #{generator_forward.1} parent=11 // pred_fallthru
        _
      // Predicated region
      $region33: #{generator_forward.1} parent=11 // pred_check
        %p221 = pneg %p165
      $region34: #{generator_forward.1} parent=11 // pred_check_branch
        %223 = sbr.rel (%p221) target = $region36
      $region35: #{generator_forward.1} parent=11 // pred_region
        _
      $region36: #{generator_forward.1} parent=11 // pred_fallthru
        _
    $region12: #{generator_forward.1} parent=5 // pred_fallthru
      _
    %p224 = scmp.lt.s32.totalorder %s13, 4
    // Predicated region
    $region37: #{generator_forward.1} parent=5 // pred_check
      %p225 = pneg %p224
    $region38: #{generator_forward.1} parent=5 // pred_check_branch
      %227 = sbr.rel (%p225) target = $region40
    $region39: #{generator_forward.1} parent=5 // pred_region
      // Predicated region
      $region41: #{generator_forward.1} parent=39 // pred_check
        %p228 = pneg %p33
      $region42: #{generator_forward.1} parent=39 // pred_check_branch
        %230 = sbr.rel (%p228) target = $region44
      $region43: #{generator_forward.1} parent=39 // pred_region
        %s231 = smul.u32 2, %s13
        %p232 = scmp.lt.s32.totalorder %s231, 7
        %s233 = scalar_select %p232, %s231, 7
        %s234 = smul.addr %s233, 8
        %s235 = scalar_lea.vmem %s0, %s234
        %s236 = smul.u32 2, %s13
      $region44: #{generator_forward.1} parent=39 // pred_fallthru
        _
    $region40: #{generator_forward.1} parent=5 // pred_fallthru
      _
    %p237 = scmp.le.s32.totalorder 1, %s13
    %p238 = scmp.lt.s32.totalorder %s13, 5
    %p239 = pnand %p237, %p238
    %p240 = pneg %p239
    // Predicated region
    $region45: #{generator_forward.1} parent=5 // pred_check
      _
    $region46: #{generator_forward.1} parent=5 // pred_check_branch
      %242 = sbr.rel (%p239) target = $region48
    $region47: #{generator_forward.1} parent=5 // pred_region
      %s243 = ssub.s32 %s13, 1
      %s244 = smul.u32 2, %s18
      %p245 = scmp.lt.s32.totalorder %s244, 7
      %s246 = scalar_select %p245, %s244, 7
      %s247 = smul.addr %s246, 8
      %s248 = scalar_lea.vmem %s0, %s247
      %p249 = pneg %p39
      %p250 = pneg %p36
      %p251 = pneg %p60
      %p252 = pneg %p57
      %p253 = pneg %p81
      %p254 = pneg %p78
      %p255 = pneg %p102
      %p256 = pneg %p99
      %p257 = pneg %p123
      %p258 = pneg %p120
      %p259 = pneg %p144
      %p260 = pneg %p141
      %p261 = pneg %p165
      %p262 = pneg %p162
      %p263 = pneg %p191
      %p264 = pneg %p188
      %s265 = smul.u32 2, %s18
      %p266 = scmp.lt.s32.totalorder %s265, 7
      %s267 = scalar_select %p266, %s265, 7
      %s268 = smul.addr %s267, 8
      %s269 = scalar_lea.vmem %s7, %s268
      %s270 = smul.u32 2, %s18
      %p271 = scmp.lt.s32.totalorder %s270, 7
      %s272 = scalar_select %p271, %s270, 7
      %s273 = smul.addr %s272, 8
      %s274 = scalar_lea.vmem %s0, %s273
      %s275 = smul.u32 2, %s18
      %s276 = smul.u32 2, %s18
      %p277 = scmp.lt.s32.totalorder %s276, 7
      %s278 = scalar_select %p277, %s276, 7
      %s279 = smul.addr %s278, 8
      %s280 = scalar_lea.vmem %s7, %s279
      %s281 = smul.u32 2, %s18
      %v282 = vld [vmem:[%s274] sm:$0xff]
      %v283 = vld [vmem:[%s274 + $0x8] sm:$0xff]
      %v284 = vld [vmem:[%s1] sm:$0xff]
      %v285 = vld [vmem:[%s1 + $0x8] sm:$0xff]
      %v286 = vld [vmem:[%s2] sm:$0x1]
      %v288 = vlaneseq
      %v289 = vshrl.u32 %v288, 7
      %v290 = vsub.s32 0, %v289
      %v291 = vrot.slane %v286, %v290
      %vm293 = vcmask 130048
      %v295 = vsel %vm293, %v282, 0
      %v298 = vsel %vm293, %v283, 0
      %300 = vmatprep.subr.mxu0 0.0
      %301 = vmatpush1.msra.mxu0 %v284
      %302 = vmatprep.subr.mxu0 0.0
      %303 = vmatpush1.msra.mxu0 %v285
      %304 = vmatprep.subr.mxu0 0.0
      %305 = vmatpush1.msra.mxu0 0.0
      %306 = vmatprep.subr.mxu0 0.0
      %307 = vmatpush1.msra.mxu0 0.0
      %308 = vmatprep.subr.mxu0 0.0
      %309 = vmatpush1.msra.mxu0 0.0
      %310 = vmatprep.subr.mxu0 0.0
      %311 = vmatpush1.msra.mxu0 0.0
      %312 = vmatprep.subr.mxu0 0.0
      %313 = vmatpush1.msra.mxu0 0.0
      %314 = vmatprep.subr.mxu0 0.0
      %315 = vmatpush1.msra.mxu0 0.0
      %316 = vmatprep.subr.mxu0 0.0
      %317 = vmatpush1.msra.mxu0 0.0
      %318 = vmatprep.subr.mxu0 0.0
      %319 = vmatpush1.msra.mxu0 0.0
      %320 = vmatprep.subr.mxu0 0.0
      %321 = vmatpush1.msra.mxu0 0.0
      %322 = vmatprep.subr.mxu0 0.0
      %323 = vmatpush1.msra.mxu0 0.0
      %324 = vmatprep.subr.mxu0 0.0
      %325 = vmatpush1.msra.mxu0 0.0
      %326 = vmatprep.subr.mxu0 0.0
      %327 = vmatpush1.msra.mxu0 0.0
      %328 = vmatprep.subr.mxu0 0.0
      %329 = vmatpush1.msra.mxu0 0.0
      %330 = vmatprep.subr.mxu0 0.0
      %331 = vmatpush1.msra.mxu0 0.0
      %332 = vmatprep.subr.mxu0 0.0
      %333 = vmatpush1.msra.mxu0 0.0
      %334 = vmatprep.subr.mxu0 0.0
      %335 = vmatpush1.msra.mxu0 0.0
      %336 = vmatprep.subr.mxu0 0.0
      %337 = vmatpush1.msra.mxu0 0.0
      %338 = vmatprep.subr.mxu0 0.0
      %339 = vmatpush1.msra.mxu0 0.0
      %340 = vmatprep.subr.mxu0 0.0
      %341 = vmatpush1.msra.mxu0 0.0
      %342 = vmatprep.subr.mxu0 0.0
      %343 = vmatpush1.msra.mxu0 0.0
      %344 = vmatprep.subr.mxu0 0.0
      %345 = vmatpush1.msra.mxu0 0.0
      %346 = vmatprep.subr.mxu0 0.0
      %347 = vmatpush1.msra.mxu0 0.0
      %348 = vmatprep.subr.mxu0 0.0
      %349 = vmatpush1.msra.mxu0 0.0
      %350 = vmatprep.subr.mxu0 0.0
      %351 = vmatpush1.msra.mxu0 0.0
      %352 = vmatprep.subr.mxu0 0.0
      %353 = vmatpush1.msra.mxu0 0.0
      %354 = vmatprep.subr.mxu0 0.0
      %355 = vmatpush1.msra.mxu0 0.0
      %356 = vmatprep.subr.mxu0 0.0
      %357 = vmatpush1.msra.mxu0 0.0
      %358 = vmatprep.subr.mxu0 0.0
      %359 = vmatpush1.msra.mxu0 0.0
      %360 = vmatprep.subr.mxu0 0.0
      %361 = vmatpush1.msra.mxu0 0.0
      %362 = vmatprep.subr.mxu0 0.0
      %363 = vmatpush1.msra.mxu0 0.0
      %364 = vmatprep.mubr.f32.mxu0 0.0
      %365 = vmatmul.mubr.f32.gmra.mrb[0].mxu0 %v295
      %v366 = vpop.f32.mrb[0].mxu0
      %v367 = vadd.f32 %v291, %v366
      %v368 = vpop.f32.mrb[0].mxu0
      %369 = vmatprep.mubr.f32.mxu0 0.0
      %370 = vmatmul.mubr.f32.gmra.mrb[0].mxu0 %v298
      %v371 = vpop.f32.mrb[0].mxu0
      %v372 = vadd.f32 %v291, %v371
      %v373 = vpop.f32.mrb[0].mxu0
      %374 = vdwg.mxu0
      %v375 = vmul.f32 %v367, 0.2
      %v376 = vmul.f32 %v372, 0.2
      %v377 = vmax.f32 %v367, %v375
      %v378 = vmax.f32 %v372, %v376
      %v379 = vld [vmem:[%s3] sm:$0xff]
      %v380 = vld [vmem:[%s3 + $0x8] sm:$0xff]
      %v381 = vld [vmem:[%s3 + $0x10] sm:$0xff]
      %v382 = vld [vmem:[%s3 + $0x18] sm:$0xff]
      %v383 = vld [vmem:[%s3 + $0x20] sm:$0xff]
      %v384 = vld [vmem:[%s3 + $0x28] sm:$0xff]
      %v385 = vld [vmem:[%s3 + $0x30] sm:$0xff]
      %v386 = vld [vmem:[%s3 + $0x38] sm:$0xff]
      %v387 = vld [vmem:[%s3 + $0x40] sm:$0xff]
      %v388 = vld [vmem:[%s3 + $0x48] sm:$0xff]
      %v389 = vld [vmem:[%s3 + $0x50] sm:$0xff]
      %v390 = vld [vmem:[%s3 + $0x58] sm:$0xff]
      %v391 = vld [vmem:[%s3 + $0x60] sm:$0xff]
      %v392 = vld [vmem:[%s3 + $0x68] sm:$0xff]
      %v393 = vld [vmem:[%s3 + $0x70] sm:$0xff]
      %v394 = vld [vmem:[%s3 + $0x78] sm:$0xff]
      %v395 = vld [vmem:[%s4] sm:$0x1]
      %v397 = vlaneseq
      %v398 = vshrl.u32 %v397, 7
      %v399 = vsub.s32 0, %v398
      %v400 = vrot.slane %v395, %v399
      %402 = vmatprep.subr.mxu0 0.0
      %403 = vmatpush1.msra.mxu0 %v379
      %404 = vmatprep.subr.mxu0 0.0
      %405 = vmatpush1.msra.mxu0 %v380
      %406 = vmatprep.subr.mxu0 0.0
      %407 = vmatpush1.msra.mxu0 %v381
      %408 = vmatprep.subr.mxu0 0.0
      %409 = vmatpush1.msra.mxu0 %v382
      %410 = vmatprep.subr.mxu0 0.0
      %411 = vmatpush1.msra.mxu0 %v383
      %412 = vmatprep.subr.mxu0 0.0
      %413 = vmatpush1.msra.mxu0 %v384
      %414 = vmatprep.subr.mxu0 0.0
      %415 = vmatpush1.msra.mxu0 %v385
      %416 = vmatprep.subr.mxu0 0.0
      %417 = vmatpush1.msra.mxu0 %v386
      %418 = vmatprep.subr.mxu0 0.0
      %419 = vmatpush1.msra.mxu0 %v387
      %420 = vmatprep.subr.mxu0 0.0
      %421 = vmatpush1.msra.mxu0 %v388
      %422 = vmatprep.subr.mxu0 0.0
      %423 = vmatpush1.msra.mxu0 %v389
      %424 = vmatprep.subr.mxu0 0.0
      %425 = vmatpush1.msra.mxu0 %v390
      %426 = vmatprep.subr.mxu0 0.0
      %427 = vmatpush1.msra.mxu0 %v391
      %428 = vmatprep.subr.mxu0 0.0
      %429 = vmatpush1.msra.mxu0 %v392
      %430 = vmatprep.subr.mxu0 0.0
      %431 = vmatpush1.msra.mxu0 %v393
      %432 = vmatprep.subr.mxu0 0.0
      %433 = vmatpush1.msra.mxu0 %v394
      %434 = vmatprep.subr.mxu0 0.0
      %435 = vmatpush1.msra.mxu0 0.0
      %436 = vmatprep.subr.mxu0 0.0
      %437 = vmatpush1.msra.mxu0 0.0
      %438 = vmatprep.subr.mxu0 0.0
      %439 = vmatpush1.msra.mxu0 0.0
      %440 = vmatprep.subr.mxu0 0.0
      %441 = vmatpush1.msra.mxu0 0.0
      %442 = vmatprep.subr.mxu0 0.0
      %443 = vmatpush1.msra.mxu0 0.0
      %444 = vmatprep.subr.mxu0 0.0
      %445 = vmatpush1.msra.mxu0 0.0
      %446 = vmatprep.subr.mxu0 0.0
      %447 = vmatpush1.msra.mxu0 0.0
      %448 = vmatprep.subr.mxu0 0.0
      %449 = vmatpush1.msra.mxu0 0.0
      %450 = vmatprep.subr.mxu0 0.0
      %451 = vmatpush1.msra.mxu0 0.0
      %452 = vmatprep.subr.mxu0 0.0
      %453 = vmatpush1.msra.mxu0 0.0
      %454 = vmatprep.subr.mxu0 0.0
      %455 = vmatpush1.msra.mxu0 0.0
      %456 = vmatprep.subr.mxu0 0.0
      %457 = vmatpush1.msra.mxu0 0.0
      %458 = vmatprep.subr.mxu0 0.0
      %459 = vmatpush1.msra.mxu0 0.0
      %460 = vmatprep.subr.mxu0 0.0
      %461 = vmatpush1.msra.mxu0 0.0
      %462 = vmatprep.subr.mxu0 0.0
      %463 = vmatpush1.msra.mxu0 0.0
      %464 = vmatprep.subr.mxu0 0.0
      %465 = vmatpush1.msra.mxu0 0.0
      %466 = vmatprep.mubr.f32.mxu0 0.0
      %467 = vmatmul.mubr.f32.gmra.mrb[0].mxu0 %v377
      %v468 = vpop.f32.mrb[0].mxu0
      %v469 = vadd.f32 %v400, %v468
      %v470 = vpop.f32.mrb[0].mxu0
      %471 = vmatprep.mubr.f32.mxu0 0.0
      %472 = vmatmul.mubr.f32.gmra.mrb[0].mxu0 %v378
      %v473 = vpop.f32.mrb[0].mxu0
      %v474 = vadd.f32 %v400, %v473
      %v475 = vpop.f32.mrb[0].mxu0
      %476 = vdwg.mxu0
      %v477 = vmul.f32 %v469, 0.2
      %v478 = vmul.f32 %v474, 0.2
      %v479 = vmax.f32 %v469, %v477
      %v480 = vmax.f32 %v474, %v478
      %v481 = vld [vmem:[%s5] sm:$0xff]
      %v482 = vld [vmem:[%s5 + $0x8] sm:$0xff]
      %v483 = vld [vmem:[%s5 + $0x10] sm:$0xff]
      %v484 = vld [vmem:[%s5 + $0x18] sm:$0xff]
      %v485 = vld [vmem:[%s5 + $0x20] sm:$0xff]
      %v486 = vld [vmem:[%s5 + $0x28] sm:$0xff]
      %v487 = vld [vmem:[%s5 + $0x30] sm:$0xff]
      %v488 = vld [vmem:[%s5 + $0x38] sm:$0xff]
      %v489 = vld [vmem:[%s5 + $0x40] sm:$0xff]
      %v490 = vld [vmem:[%s5 + $0x48] sm:$0xff]
      %v491 = vld [vmem:[%s5 + $0x50] sm:$0xff]
      %v492 = vld [vmem:[%s5 + $0x58] sm:$0xff]
      %v493 = vld [vmem:[%s5 + $0x60] sm:$0xff]
      %v494 = vld [vmem:[%s5 + $0x68] sm:$0xff]
      %v495 = vld [vmem:[%s5 + $0x70] sm:$0xff]
      %v496 = vld [vmem:[%s5 + $0x78] sm:$0xff]
      %v497 = vld [vmem:[%s6] sm:$0x1]
      %v499 = vlaneseq
      %v500 = vshrl.u32 %v499, 7
      %v501 = vsub.s32 0, %v500
      %v502 = vrot.slane %v497, %v501
      %504 = vmatprep.subr.mxu0 0.0
      %505 = vmatpush1.msra.mxu0 %v481
      %506 = vmatprep.subr.mxu0 0.0
      %507 = vmatpush1.msra.mxu0 %v482
      %508 = vmatprep.subr.mxu0 0.0
      %509 = vmatpush1.msra.mxu0 %v483
      %510 = vmatprep.subr.mxu0 0.0
      %511 = vmatpush1.msra.mxu0 %v484
      %512 = vmatprep.subr.mxu0 0.0
      %513 = vmatpush1.msra.mxu0 %v485
      %514 = vmatprep.subr.mxu0 0.0
      %515 = vmatpush1.msra.mxu0 %v486
      %516 = vmatprep.subr.mxu0 0.0
      %517 = vmatpush1.msra.mxu0 %v487
      %518 = vmatprep.subr.mxu0 0.0
      %519 = vmatpush1.msra.mxu0 %v488
      %520 = vmatprep.subr.mxu0 0.0
      %521 = vmatpush1.msra.mxu0 %v489
      %522 = vmatprep.subr.mxu0 0.0
      %523 = vmatpush1.msra.mxu0 %v490
      %524 = vmatprep.subr.mxu0 0.0
      %525 = vmatpush1.msra.mxu0 %v491
      %526 = vmatprep.subr.mxu0 0.0
      %527 = vmatpush1.msra.mxu0 %v492
      %528 = vmatprep.subr.mxu0 0.0
      %529 = vmatpush1.msra.mxu0 %v493
      %530 = vmatprep.subr.mxu0 0.0
      %531 = vmatpush1.msra.mxu0 %v494
      %532 = vmatprep.subr.mxu0 0.0
      %533 = vmatpush1.msra.mxu0 %v495
      %534 = vmatprep.subr.mxu0 0.0
      %535 = vmatpush1.msra.mxu0 %v496
      %536 = vmatprep.subr.mxu0 0.0
      %537 = vmatpush1.msra.mxu0 0.0
      %538 = vmatprep.subr.mxu0 0.0
      %539 = vmatpush1.msra.mxu0 0.0
      %540 = vmatprep.subr.mxu0 0.0
      %541 = vmatpush1.msra.mxu0 0.0
      %542 = vmatprep.subr.mxu0 0.0
      %543 = vmatpush1.msra.mxu0 0.0
      %544 = vmatprep.subr.mxu0 0.0
      %545 = vmatpush1.msra.mxu0 0.0
      %546 = vmatprep.subr.mxu0 0.0
      %547 = vmatpush1.msra.mxu0 0.0
      %548 = vmatprep.subr.mxu0 0.0
      %549 = vmatpush1.msra.mxu0 0.0
      %550 = vmatprep.subr.mxu0 0.0
      %551 = vmatpush1.msra.mxu0 0.0
      %552 = vmatprep.subr.mxu0 0.0
      %553 = vmatpush1.msra.mxu0 0.0
      %554 = vmatprep.subr.mxu0 0.0
      %555 = vmatpush1.msra.mxu0 0.0
      %556 = vmatprep.subr.mxu0 0.0
      %557 = vmatpush1.msra.mxu0 0.0
      %558 = vmatprep.subr.mxu0 0.0
      %559 = vmatpush1.msra.mxu0 0.0
      %560 = vmatprep.subr.mxu0 0.0
      %561 = vmatpush1.msra.mxu0 0.0
      %562 = vmatprep.subr.mxu0 0.0
      %563 = vmatpush1.msra.mxu0 0.0
      %564 = vmatprep.subr.mxu0 0.0
      %565 = vmatpush1.msra.mxu0 0.0
      %566 = vmatprep.subr.mxu0 0.0
      %567 = vmatpush1.msra.mxu0 0.0
      %568 = vmatprep.mubr.f32.mxu0 0.0
      %569 = vmatmul.mubr.f32.gmra.mrb[0].mxu0 %v479
      %v570 = vpop.f32.mrb[0].mxu0
      %v571 = vadd.f32 %v502, %v570
      %v572 = vpop.f32.mrb[0].mxu0
      %573 = vmatprep.mubr.f32.mxu0 0.0
      %574 = vmatmul.mubr.f32.gmra.mrb[0].mxu0 %v480
      %v575 = vpop.f32.mrb[0].mxu0
      %v576 = vadd.f32 %v502, %v575
      %v577 = vpop.f32.mrb[0].mxu0
      %578 = vdwg.mxu0
      %v579 = vtanh.pop %v571
      %v580 = vtanh.pop %v576
      %581 = vst.msk [vmem:[%s280] sm:$0xff] %vm293, %v579
      %582 = vst.msk [vmem:[%s280 + $0x8] sm:$0xff] %vm293, %v580
      %s583 = smul.u32 2, %s18
      %p584 = scmp.lt.s32.totalorder %s583, 7
      %s585 = scalar_select %p584, %s583, 7
      %s586 = smul.addr %s585, 8
      %s587 = scalar_lea.vmem %s7, %s586
      // Predicated region
      $region49: #{generator_forward.1} parent=47 // pred_check
        %p588 = pneg %p188
      $region50: #{generator_forward.1} parent=47 // pred_check_branch
        %590 = sbr.rel (%p588) target = $region52
      $region51: #{generator_forward.1} parent=47 // pred_region
        %s591 = smul.u32 2, %s18
      $region52: #{generator_forward.1} parent=47 // pred_fallthru
        _
    $region48: #{generator_forward.1} parent=5 // pred_fallthru
      _
    %p592 = scmp.le.s32.totalorder 2, %s13
    // Predicated region
    $region53: #{generator_forward.1} parent=5 // pred_check
      %p593 = pneg %p592
    $region54: #{generator_forward.1} parent=5 // pred_check_branch
      %595 = sbr.rel (%p593) target = $region56
    $region55: #{generator_forward.1} parent=5 // pred_region
      %s596 = ssub.s32 %s13, 2
      // Predicated region
      $region57: #{generator_forward.1} parent=55 // pred_check
        %p597 = pneg %p194
      $region58: #{generator_forward.1} parent=55 // pred_check_branch
        %599 = sbr.rel (%p597) target = $region60
      $region59: #{generator_forward.1} parent=55 // pred_region
        %s600 = smul.u32 2, %s19
        %p601 = scmp.lt.s32.totalorder %s600, 7
        %s602 = scalar_select %p601, %s600, 7
        %s603 = smul.addr %s602, 8
        %s604 = scalar_lea.vmem %s7, %s603
      $region60: #{generator_forward.1} parent=55 // pred_fallthru
        _
    $region56: #{generator_forward.1} parent=5 // pred_fallthru
      _
  $region6: #{generator_forward.1} parent=0 // loop_footer
    %s17 = sadd.s32 1, %s13
  $region7: #{generator_forward.1} parent=0 // loop_footer_branch
    %12 = sbr.rel target = $region3
  $region8: #{generator_forward.1} parent=0 // loop_exit
    _

</llo_original>
